<compile_context>
chip_gen: v5e
topology: v5e:2x2
jax: 0.10.0
libtpu: 0.0.40
codegen_flags: <defaults>
</compile_context>

<pallas_src>
import jax
import jax.numpy as jnp
from jax.experimental import pallas as pl
from jax.experimental.pallas import tpu as pltpu


def _round_up(x, m):
    return (x + m - 1) // m * m


def resnet_kernel(z_ref,
                  w1_ref, b1_ref,
                  w2_ref, b2_ref,
                  w3_ref, b3_ref,
                  w4_ref, b4_ref,
                  o_ref):
    """Fused: z = z + relu(z @ W_i^T + b_i), for i = 1..4.

    Weights arrive pre-transposed (already W.T, shape (Dp, Dp)) and possibly
    pre-cast to bf16; biases are (1, Dp) f32. Matmuls accumulate in f32 on the
    MXU; residual add + ReLU stay in f32 on the VPU.
    """
    z = z_ref[...].astype(jnp.float32)

    # Hoist bias loads (f32) out of the per-layer expressions.
    biases = (b1_ref[...].astype(jnp.float32),
              b2_ref[...].astype(jnp.float32),
              b3_ref[...].astype(jnp.float32),
              b4_ref[...].astype(jnp.float32))

    for w_ref, b in zip((w1_ref, w2_ref, w3_ref, w4_ref), biases):
        h = jnp.dot(z.astype(w_ref.dtype), w_ref[...],
                    preferred_element_type=jnp.float32)
        z = z + jnp.maximum(h + b, 0.0)      # residual + ReLU in f32

    o_ref[...] = z.astype(o_ref.dtype)


def prepare_params(params, d_model, *, compute_dtype=jnp.bfloat16):
    """One-time parameter prep: transpose, pad d_model -> multiple of 128,
    cast weights to the MXU compute dtype. Returns (prepared_params, Dp)."""
    Dp = _round_up(max(d_model, 128), 128)
    prepared = []
    for (w, b) in params:
        w = jnp.asarray(w, jnp.float32)          # torch layout (out, in)
        b = jnp.asarray(b, jnp.float32)
        wt = jnp.zeros((Dp, Dp), compute_dtype)
        wt = wt.at[:d_model, :d_model].set(w.T.astype(compute_dtype))
        bp = jnp.zeros((1, Dp), jnp.float32)
        bp = bp.at[:, :d_model].set(b.reshape(1, d_model))
        prepared.append((wt, bp))
    return prepared, Dp


def resnet_forward(z, prepared_params, d_padded, *, tile_rows=256):
    """z: (S, B, D) float32. prepared_params: output of prepare_params."""
    S, B, D = z.shape
    Dp = d_padded
    rows = S * B

    # Row-tile size: as large as possible (MXU M utilization), multiple of 8,
    # never larger than the (padded) row count.
    tm = max(8, min(tile_rows, _round_up(rows, 8)))
    tm = _round_up(tm, 8)
    rows_p = _round_up(rows, tm)
    # Keep >=4 grid steps so the parallel axis can shard across v7x's 2 TCs,
    # but never drop below 256-row tiles.
    while rows_p // tm < 4 and tm >= 512:
        tm //= 2
        rows_p = _round_up(rows, tm)

    z2d = z.reshape(rows, D)
    if rows_p != rows or Dp != D:
        zp = jnp.zeros((rows_p, Dp), z.dtype).at[:rows, :D].set(z2d)
    else:
        zp = z2d

    kernel_args = [zp]
    for (wt, bp) in prepared_params:
        kernel_args.append(wt)
        kernel_args.append(bp)

    grid = (rows_p // tm,)

    z_spec = pl.BlockSpec((tm, Dp), lambda i: (i, 0))
    o_spec = pl.BlockSpec((tm, Dp), lambda i: (i, 0))

    def _const_spec(shape):
        # Constant index_map -> multi-buffering buys nothing; single-buffer to
        # halve resident weight VMEM (important on v7x's 64 MiB VMEM).
        kwargs = {}
        if hasattr(pl, "Buffered"):
            kwargs["pipeline_mode"] = pl.Buffered(1)
        return pl.BlockSpec(shape, lambda i: (0, 0), **kwargs)

    in_specs = [z_spec]
    for _ in range(4):
        in_specs.append(_const_spec((Dp, Dp)))   # weight
        in_specs.append(_const_spec((1, Dp)))    # bias

    w_itemsize = jnp.dtype(prepared_params[0][0].dtype).itemsize
    flops = 4 * 2 * rows_p * Dp * Dp + 4 * 3 * rows_p * Dp
    bytes_accessed = (2 * rows_p * Dp * 4          # z in + out (f32)
                      + 4 * Dp * Dp * w_itemsize   # weights
                      + 4 * Dp * 4)                # biases
    cost = pl.CostEstimate(flops=int(flops), transcendentals=0,
                           bytes_accessed=int(bytes_accessed))

    # VMEM budget: z in/out double-buffered, weights/biases single-buffered.
    vmem_bytes = (2 * 2 * tm * Dp * 4
                  + 4 * Dp * Dp * w_itemsize
                  + 4 * Dp * 4)
    cp_kwargs = dict(dimension_semantics=("parallel",))
    if vmem_bytes > 24 * 1024 * 1024:
        cp_kwargs["vmem_limit_bytes"] = min(int(vmem_bytes * 5 // 4), 64 * 1024 * 1024)

    out = pl.pallas_call(
        resnet_kernel,
        out_shape=jax.ShapeDtypeStruct((rows_p, Dp), z.dtype),
        grid_spec=pltpu.PrefetchScalarGridSpec(
            num_scalar_prefetch=0,
            grid=grid,
            in_specs=in_specs,
            out_specs=o_spec,
        ),
        compiler_params=pltpu.CompilerParams(**cp_kwargs),
        cost_estimate=cost,
    )(*kernel_args)

    return out[:rows, :D].reshape(S, B, D)


def init_params(key, d_model):
    """nn.Linear-style init: uniform(-1/sqrt(D), 1/sqrt(D))."""
    params = []
    bound = 1.0 / jnp.sqrt(d_model)
    for _ in range(4):
        kw, kb, key = jax.random.split(key, 3)
        w = jax.random.uniform(kw, (d_model, d_model), jnp.float32, -bound, bound)
        b = jax.random.uniform(kb, (d_model,), jnp.float32, -bound, bound)
        params.append((w, b))
    return params


def resnet_reference(z, params):
    """Pure-JAX reference of the PyTorch forward (for validation)."""
    for (w, b) in params:
        z = z + jax.nn.relu(jnp.einsum('sbd,od->sbo', z, w) + b)
    return z
    # TODO(synk): the PyTorch module's debug() size-logging has no Pallas
    # equivalent and is intentionally omitted (pure logging side effect).


if __name__ == "__main__":
    key = jax.random.PRNGKey(0)
    k_z, k_p = jax.random.split(key)

    S, B, D = 8, 2, 32          # seq=8, batch=2, d_model=32 (small demo)
    z = jax.random.normal(k_z, (S, B, D), jnp.float32)
    params = init_params(k_p, D)
    ref = resnet_reference(z, params)

    # f32 MXU path: exact check against the pure-JAX reference.
    prep_f32, Dp = prepare_params(params, D, compute_dtype=jnp.float32)
    out_f32 = jax.block_until_ready(resnet_forward(z, prep_f32, Dp))
    assert out_f32.shape == (S, B, D)
    assert jnp.allclose(out_f32, ref, atol=1e-5, rtol=1e-5), "f32 mismatch vs reference"

    # bf16 MXU path (v6e/v7x fast path): f32 accumulation + f32 residual/ReLU.
    prep_bf16, Dp = prepare_params(params, D, compute_dtype=jnp.bfloat16)
    out_bf16 = jax.block_until_ready(resnet_forward(z, prep_bf16, Dp))
    assert out_bf16.shape == (S, B, D)
    assert jnp.allclose(out_bf16, ref, atol=1e-1, rtol=1e-1), "bf16 mismatch vs reference"

    print("KERNEL_OK")
</pallas_src>

<mosaic_0001>
module attributes {stable_mosaic.version = 11 : i64} {
  func.func @resnet_kernel(%arg0: i32, %arg1: memref<16x128xf32, #tpu.memory_space<vmem>>, %arg2: memref<128x128xf32, #tpu.memory_space<vmem>>, %arg3: memref<1x128xf32, #tpu.memory_space<vmem>>, %arg4: memref<128x128xf32, #tpu.memory_space<vmem>>, %arg5: memref<1x128xf32, #tpu.memory_space<vmem>>, %arg6: memref<128x128xf32, #tpu.memory_space<vmem>>, %arg7: memref<1x128xf32, #tpu.memory_space<vmem>>, %arg8: memref<128x128xf32, #tpu.memory_space<vmem>>, %arg9: memref<1x128xf32, #tpu.memory_space<vmem>>, %arg10: memref<16x128xf32, #tpu.memory_space<vmem>>) attributes {dimension_semantics = [#tpu.dimension_semantics<parallel>], iteration_bounds = array<i64: 1>, scalar_prefetch = 0 : i64, scratch_operands = 0 : i64, tpu.core_type = #tpu.core_type<tc>, window_params = [{transform_indices = @transform_0, window_bounds = array<i64: 16, 128>}, {pipeline_mode = #tpu.pipeline_mode<synchronous>, transform_indices = @transform_1, window_bounds = array<i64: 128, 128>}, {pipeline_mode = #tpu.pipeline_mode<synchronous>, transform_indices = @transform_2, window_bounds = array<i64: 1, 128>}, {pipeline_mode = #tpu.pipeline_mode<synchronous>, transform_indices = @transform_3, window_bounds = array<i64: 128, 128>}, {pipeline_mode = #tpu.pipeline_mode<synchronous>, transform_indices = @transform_4, window_bounds = array<i64: 1, 128>}, {pipeline_mode = #tpu.pipeline_mode<synchronous>, transform_indices = @transform_5, window_bounds = array<i64: 128, 128>}, {pipeline_mode = #tpu.pipeline_mode<synchronous>, transform_indices = @transform_6, window_bounds = array<i64: 1, 128>}, {pipeline_mode = #tpu.pipeline_mode<synchronous>, transform_indices = @transform_7, window_bounds = array<i64: 128, 128>}, {pipeline_mode = #tpu.pipeline_mode<synchronous>, transform_indices = @transform_8, window_bounds = array<i64: 1, 128>}, {transform_indices = @transform_9, window_bounds = array<i64: 16, 128>}]} {
    %c0 = arith.constant 0 : index
    %c0_0 = arith.constant 0 : index
    %0 = vector.load %arg1[%c0, %c0_0] : memref<16x128xf32, #tpu.memory_space<vmem>>, vector<16x128xf32>
    %c0_1 = arith.constant 0 : index
    %c0_2 = arith.constant 0 : index
    %1 = vector.load %arg3[%c0_1, %c0_2] : memref<1x128xf32, #tpu.memory_space<vmem>>, vector<1x128xf32>
    %c0_3 = arith.constant 0 : index
    %c0_4 = arith.constant 0 : index
    %2 = vector.load %arg5[%c0_3, %c0_4] : memref<1x128xf32, #tpu.memory_space<vmem>>, vector<1x128xf32>
    %c0_5 = arith.constant 0 : index
    %c0_6 = arith.constant 0 : index
    %3 = vector.load %arg7[%c0_5, %c0_6] : memref<1x128xf32, #tpu.memory_space<vmem>>, vector<1x128xf32>
    %c0_7 = arith.constant 0 : index
    %c0_8 = arith.constant 0 : index
    %4 = vector.load %arg9[%c0_7, %c0_8] : memref<1x128xf32, #tpu.memory_space<vmem>>, vector<1x128xf32>
    %c0_9 = arith.constant 0 : index
    %c0_10 = arith.constant 0 : index
    %5 = vector.load %arg2[%c0_9, %c0_10] : memref<128x128xf32, #tpu.memory_space<vmem>>, vector<128x128xf32>
    %cst = arith.constant dense<0.000000e+00> : vector<16x128xf32>
    %6 = tpu.matmul %0, %5, %cst {dimension_numbers = #tpu.dot_dimension_numbers<[1], [0], [0], [1], [0, 0, 1, 1], [], []>} : vector<16x128xf32>, vector<128x128xf32>, vector<16x128xf32> -> vector<16x128xf32>
    %7 = vector.broadcast %1 : vector<1x128xf32> to vector<16x128xf32>
    %8 = arith.addf %6, %7 : vector<16x128xf32>
    %cst_11 = arith.constant 0.000000e+00 : f32
    %9 = vector.broadcast %cst_11 : f32 to vector<16x128xf32>
    %10 = arith.maximumf %8, %9 : vector<16x128xf32>
    %11 = arith.addf %0, %10 : vector<16x128xf32>
    %c0_12 = arith.constant 0 : index
    %c0_13 = arith.constant 0 : index
    %12 = vector.load %arg4[%c0_12, %c0_13] : memref<128x128xf32, #tpu.memory_space<vmem>>, vector<128x128xf32>
    %cst_14 = arith.constant dense<0.000000e+00> : vector<16x128xf32>
    %13 = tpu.matmul %11, %12, %cst_14 {dimension_numbers = #tpu.dot_dimension_numbers<[1], [0], [0], [1], [0, 0, 1, 1], [], []>} : vector<16x128xf32>, vector<128x128xf32>, vector<16x128xf32> -> vector<16x128xf32>
    %14 = vector.broadcast %2 : vector<1x128xf32> to vector<16x128xf32>
    %15 = arith.addf %13, %14 : vector<16x128xf32>
    %cst_15 = arith.constant 0.000000e+00 : f32
    %16 = vector.broadcast %cst_15 : f32 to vector<16x128xf32>
    %17 = arith.maximumf %15, %16 : vector<16x128xf32>
    %18 = arith.addf %11, %17 : vector<16x128xf32>
    %c0_16 = arith.constant 0 : index
    %c0_17 = arith.constant 0 : index
    %19 = vector.load %arg6[%c0_16, %c0_17] : memref<128x128xf32, #tpu.memory_space<vmem>>, vector<128x128xf32>
    %cst_18 = arith.constant dense<0.000000e+00> : vector<16x128xf32>
    %20 = tpu.matmul %18, %19, %cst_18 {dimension_numbers = #tpu.dot_dimension_numbers<[1], [0], [0], [1], [0, 0, 1, 1], [], []>} : vector<16x128xf32>, vector<128x128xf32>, vector<16x128xf32> -> vector<16x128xf32>
    %21 = vector.broadcast %3 : vector<1x128xf32> to vector<16x128xf32>
    %22 = arith.addf %20, %21 : vector<16x128xf32>
    %cst_19 = arith.constant 0.000000e+00 : f32
    %23 = vector.broadcast %cst_19 : f32 to vector<16x128xf32>
    %24 = arith.maximumf %22, %23 : vector<16x128xf32>
    %25 = arith.addf %18, %24 : vector<16x128xf32>
    %c0_20 = arith.constant 0 : index
    %c0_21 = arith.constant 0 : index
    %26 = vector.load %arg8[%c0_20, %c0_21] : memref<128x128xf32, #tpu.memory_space<vmem>>, vector<128x128xf32>
    %cst_22 = arith.constant dense<0.000000e+00> : vector<16x128xf32>
    %27 = tpu.matmul %25, %26, %cst_22 {dimension_numbers = #tpu.dot_dimension_numbers<[1], [0], [0], [1], [0, 0, 1, 1], [], []>} : vector<16x128xf32>, vector<128x128xf32>, vector<16x128xf32> -> vector<16x128xf32>
    %28 = vector.broadcast %4 : vector<1x128xf32> to vector<16x128xf32>
    %29 = arith.addf %27, %28 : vector<16x128xf32>
    %cst_23 = arith.constant 0.000000e+00 : f32
    %30 = vector.broadcast %cst_23 : f32 to vector<16x128xf32>
    %31 = arith.maximumf %29, %30 : vector<16x128xf32>
    %32 = arith.addf %25, %31 : vector<16x128xf32>
    %c0_24 = arith.constant 0 : index
    %c0_25 = arith.constant 0 : index
    %33 = vector.load %arg10[%c0_24, %c0_25] : memref<16x128xf32, #tpu.memory_space<vmem>>, vector<16x128xf32>
    tpu.vector_store %arg10[%c0_24, %c0_25], %32 {strides = array<i32>} : memref<16x128xf32, #tpu.memory_space<vmem>>, vector<16x128xf32>,
    return
  }
  func.func @transform_0(%arg0: i32) -> (i32, i32) {
    %c0_i32 = arith.constant 0 : i32
    %c0_i32_0 = arith.constant 0 : i32
    return %arg0, %c0_i32 : i32, i32
  }
  func.func @transform_1(%arg0: i32) -> (i32, i32) {
    %c0_i32 = arith.constant 0 : i32
    %c0_i32_0 = arith.constant 0 : i32
    %c0_i32_1 = arith.constant 0 : i32
    return %c0_i32, %c0_i32_0 : i32, i32
  }
  func.func @transform_2(%arg0: i32) -> (i32, i32) {
    %c0_i32 = arith.constant 0 : i32
    %c0_i32_0 = arith.constant 0 : i32
    %c0_i32_1 = arith.constant 0 : i32
    return %c0_i32, %c0_i32_0 : i32, i32
  }
  func.func @transform_3(%arg0: i32) -> (i32, i32) {
    %c0_i32 = arith.constant 0 : i32
    %c0_i32_0 = arith.constant 0 : i32
    %c0_i32_1 = arith.constant 0 : i32
    return %c0_i32, %c0_i32_0 : i32, i32
  }
  func.func @transform_4(%arg0: i32) -> (i32, i32) {
    %c0_i32 = arith.constant 0 : i32
    %c0_i32_0 = arith.constant 0 : i32
    %c0_i32_1 = arith.constant 0 : i32
    return %c0_i32, %c0_i32_0 : i32, i32
  }
  func.func @transform_5(%arg0: i32) -> (i32, i32) {
    %c0_i32 = arith.constant 0 : i32
    %c0_i32_0 = arith.constant 0 : i32
    %c0_i32_1 = arith.constant 0 : i32
    return %c0_i32, %c0_i32_0 : i32, i32
  }
  func.func @transform_6(%arg0: i32) -> (i32, i32) {
    %c0_i32 = arith.constant 0 : i32
    %c0_i32_0 = arith.constant 0 : i32
    %c0_i32_1 = arith.constant 0 : i32
    return %c0_i32, %c0_i32_0 : i32, i32
  }
  func.func @transform_7(%arg0: i32) -> (i32, i32) {
    %c0_i32 = arith.constant 0 : i32
    %c0_i32_0 = arith.constant 0 : i32
    %c0_i32_1 = arith.constant 0 : i32
    return %c0_i32, %c0_i32_0 : i32, i32
  }
  func.func @transform_8(%arg0: i32) -> (i32, i32) {
    %c0_i32 = arith.constant 0 : i32
    %c0_i32_0 = arith.constant 0 : i32
    %c0_i32_1 = arith.constant 0 : i32
    return %c0_i32, %c0_i32_0 : i32, i32
  }
  func.func @transform_9(%arg0: i32) -> (i32, i32) {
    %c0_i32 = arith.constant 0 : i32
    %c0_i32_0 = arith.constant 0 : i32
    return %arg0, %c0_i32 : i32, i32
  }
}

</mosaic_0001>

<llo_original>
// kernel: tpu_custom_call.1
$region0: #{tpu_custom_call.1}
  #allocation0 [shape = 'u32[]', space=smem, size = 0x4, offset = 0x4, fixed_abs, tag = 'smem constant byte address 0x4 - core index']
  #allocation1 [shape = 'u32[72,128]{1,0:T(1,128)}', space=vmem, size = 0x9000, scoped, tag = 'internal scratch']
  %s0 = inlined_call_operand.hbm [shape: f32[16,128], index: 0, kind: input, shape index: {}]
  %s1 = inlined_call_operand.hbm [shape: f32[128,128], index: 1, kind: input, shape index: {}]
  %s2 = inlined_call_operand.vmem [shape: f32[1,128], index: 2, kind: input, shape index: {}]
  %s3 = inlined_call_operand.hbm [shape: f32[128,128], index: 3, kind: input, shape index: {}]
  %s4 = inlined_call_operand.vmem [shape: f32[1,128], index: 4, kind: input, shape index: {}]
  %s5 = inlined_call_operand.hbm [shape: f32[128,128], index: 5, kind: input, shape index: {}]
  %s6 = inlined_call_operand.vmem [shape: f32[1,128], index: 6, kind: input, shape index: {}]
  %s7 = inlined_call_operand.hbm [shape: f32[128,128], index: 7, kind: input, shape index: {}]
  %s8 = inlined_call_operand.vmem [shape: f32[1,128], index: 8, kind: input, shape index: {}]
  %s9 = inlined_call_operand.hbm [shape: f32[16,128], index: 9, kind: output, shape index: {}]
  %s10 = sld [smem:[#allocation0]]
  $region66: #{tpu_custom_call.1} parent=0
    _
  %s12 = ssub.s32 1, %s10
  %s13 = scalar_select 0, %s12, %s10
  $region1: #{tpu_custom_call.1} parent=0
    #allocation2 [shape = 'u8[8192]{0}', space=vmem, size = 0x2000, scoped, tag = 'input window, operand 0, single buffered']
    #allocation3 [shape = 's32[1]{0}', space=sflag, size = 0x4, scoped, tag = 'scoped memory for tpu_custom_call.1']
    #allocation4 [shape = 's32[1]{0}', space=sflag, size = 0x4, scoped, tag = 'scoped memory for tpu_custom_call.1']
    #allocation5 [shape = 'u8[65536]{0}', space=vmem, size = 0x10000, scoped, tag = 'input window, operand 1, single buffered']
    #allocation6 [shape = 's32[1]{0}', space=sflag, size = 0x4, scoped, tag = 'scoped memory for tpu_custom_call.1']
    #allocation7 [shape = 'u8[65536]{0}', space=vmem, size = 0x10000, scoped, tag = 'input window, operand 3, single buffered']
    #allocation8 [shape = 'u8[65536]{0}', space=vmem, size = 0x10000, scoped, tag = 'input window, operand 5, single buffered']
    #allocation9 [shape = 's32[1]{0}', space=sflag, size = 0x4, scoped, tag = 'scoped memory for tpu_custom_call.1']
    #allocation10 [shape = 'u8[65536]{0}', space=vmem, size = 0x10000, scoped, tag = 'input window, operand 7, single buffered']
    #allocation11 [shape = 'u8[8192]{0}', space=vmem, size = 0x2000, scoped, tag = 'output window, operand 0, single buffered']
    %14 = vsyncpa [#allocation3], 0
    %15 = vsyncpa [#allocation6], 0
    %16 = vsyncpa [#allocation9], 0
    %17 = vsyncpa [#allocation4], 0
    // Predicated region
    $region2: #{tpu_custom_call.1} parent=1 // pred_check
      _
    $region3: #{tpu_custom_call.1} parent=1 // pred_check_branch
      %19 = sbr.rel (0) target = $region5
    $region4: #{tpu_custom_call.1} parent=1 // pred_region
      %21 = vsyncadd [#allocation3], 0
      %s22 = sshll.u32 %s0, 4
      %s23 = int_to_ptr.hbm [resolvable:$true] %s22
      %s24 = sshll.u32 [#allocation2], 4
      %s25 = int_to_ptr.vmem [resolvable:$true] %s24
      %30 = dma.hbm_to_vmem [thread:$0]  %s23, 256, %s25, [#allocation3], 128, 128, 8
    $region5: #{tpu_custom_call.1} parent=1 // pred_fallthru
      _
    // Predicated region
    $region6: #{tpu_custom_call.1} parent=1 // pred_check
      _
    $region7: #{tpu_custom_call.1} parent=1 // pred_check_branch
      %32 = sbr.rel (0) target = $region9
    $region8: #{tpu_custom_call.1} parent=1 // pred_region
      %34 = vsyncadd [#allocation6], 0
      %s35 = sshll.u32 %s1, 4
      %s36 = int_to_ptr.hbm [resolvable:$true] %s35
      %s37 = sshll.u32 [#allocation5], 4
      %s38 = int_to_ptr.vmem [resolvable:$true] %s37
      %43 = dma.hbm_to_vmem [thread:$0]  %s36, 2048, %s38, [#allocation6], 128, 128, 8
    $region9: #{tpu_custom_call.1} parent=1 // pred_fallthru
      _
    // Predicated region
    $region10: #{tpu_custom_call.1} parent=1 // pred_check
      _
    $region11: #{tpu_custom_call.1} parent=1 // pred_check_branch
      %45 = sbr.rel (0) target = $region13
    $region12: #{tpu_custom_call.1} parent=1 // pred_region
      _
    $region13: #{tpu_custom_call.1} parent=1 // pred_fallthru
      _
    // Predicated region
    $region14: #{tpu_custom_call.1} parent=1 // pred_check
      _
    $region15: #{tpu_custom_call.1} parent=1 // pred_check_branch
      %47 = sbr.rel (0) target = $region17
    $region16: #{tpu_custom_call.1} parent=1 // pred_region
      %49 = vsyncadd [#allocation6], 0
      %s50 = sshll.u32 %s3, 4
      %s51 = int_to_ptr.hbm [resolvable:$true] %s50
      %s52 = sshll.u32 [#allocation7], 4
      %s53 = int_to_ptr.vmem [resolvable:$true] %s52
      %58 = dma.hbm_to_vmem [thread:$0]  %s51, 2048, %s53, [#allocation6], 128, 128, 8
    $region17: #{tpu_custom_call.1} parent=1 // pred_fallthru
      _
    // Predicated region
    $region18: #{tpu_custom_call.1} parent=1 // pred_check
      _
    $region19: #{tpu_custom_call.1} parent=1 // pred_check_branch
      %60 = sbr.rel (0) target = $region21
    $region20: #{tpu_custom_call.1} parent=1 // pred_region
      _
    $region21: #{tpu_custom_call.1} parent=1 // pred_fallthru
      _
    // Predicated region
    $region22: #{tpu_custom_call.1} parent=1 // pred_check
      _
    $region23: #{tpu_custom_call.1} parent=1 // pred_check_branch
      %62 = sbr.rel (0) target = $region25
    $region24: #{tpu_custom_call.1} parent=1 // pred_region
      %64 = vsyncadd [#allocation9], 0
      %s65 = sshll.u32 %s5, 4
      %s66 = int_to_ptr.hbm [resolvable:$true] %s65
      %s67 = sshll.u32 [#allocation8], 4
      %s68 = int_to_ptr.vmem [resolvable:$true] %s67
      %73 = dma.hbm_to_vmem [thread:$0]  %s66, 2048, %s68, [#allocation9], 128, 128, 8
    $region25: #{tpu_custom_call.1} parent=1 // pred_fallthru
      _
    // Predicated region
    $region26: #{tpu_custom_call.1} parent=1 // pred_check
      _
    $region27: #{tpu_custom_call.1} parent=1 // pred_check_branch
      %75 = sbr.rel (0) target = $region29
    $region28: #{tpu_custom_call.1} parent=1 // pred_region
      _
    $region29: #{tpu_custom_call.1} parent=1 // pred_fallthru
      _
    // Predicated region
    $region30: #{tpu_custom_call.1} parent=1 // pred_check
      _
    $region31: #{tpu_custom_call.1} parent=1 // pred_check_branch
      %77 = sbr.rel (0) target = $region33
    $region32: #{tpu_custom_call.1} parent=1 // pred_region
      %79 = vsyncadd [#allocation9], 0
      %s80 = sshll.u32 %s7, 4
      %s81 = int_to_ptr.hbm [resolvable:$true] %s80
      %s82 = sshll.u32 [#allocation10], 4
      %s83 = int_to_ptr.vmem [resolvable:$true] %s82
      %88 = dma.hbm_to_vmem [thread:$0]  %s81, 2048, %s83, [#allocation9], 128, 128, 8
    $region33: #{tpu_custom_call.1} parent=1 // pred_fallthru
      _
    // Predicated region
    $region34: #{tpu_custom_call.1} parent=1 // pred_check
      _
    $region35: #{tpu_custom_call.1} parent=1 // pred_check_branch
      %90 = sbr.rel (0) target = $region37
    $region36: #{tpu_custom_call.1} parent=1 // pred_region
      _
    $region37: #{tpu_custom_call.1} parent=1 // pred_fallthru
      _
    // Predicated region
    $region38: #{tpu_custom_call.1} parent=1 // pred_check
      _
    $region39: #{tpu_custom_call.1} parent=1 // pred_check_branch
      %92 = sbr.rel (0) target = $region41
    $region40: #{tpu_custom_call.1} parent=1 // pred_region
      %94 = dma.done [#allocation3], 256
    $region41: #{tpu_custom_call.1} parent=1 // pred_fallthru
      _
    // Predicated region
    $region42: #{tpu_custom_call.1} parent=1 // pred_check
      _
    $region43: #{tpu_custom_call.1} parent=1 // pred_check_branch
      %96 = sbr.rel (0) target = $region45
    $region44: #{tpu_custom_call.1} parent=1 // pred_region
      %98 = dma.done [#allocation6], 2048
    $region45: #{tpu_custom_call.1} parent=1 // pred_fallthru
      _
    // Predicated region
    $region46: #{tpu_custom_call.1} parent=1 // pred_check
      _
    $region47: #{tpu_custom_call.1} parent=1 // pred_check_branch
      %100 = sbr.rel (0) target = $region49
    $region48: #{tpu_custom_call.1} parent=1 // pred_region
      %102 = dma.done [#allocation6], 2048
    $region49: #{tpu_custom_call.1} parent=1 // pred_fallthru
      _
    // Predicated region
    $region50: #{tpu_custom_call.1} parent=1 // pred_check
      _
    $region51: #{tpu_custom_call.1} parent=1 // pred_check_branch
      %104 = sbr.rel (0) target = $region53
    $region52: #{tpu_custom_call.1} parent=1 // pred_region
      %106 = dma.done [#allocation9], 2048
    $region53: #{tpu_custom_call.1} parent=1 // pred_fallthru
      _
    // Predicated region
    $region54: #{tpu_custom_call.1} parent=1 // pred_check
      _
    $region55: #{tpu_custom_call.1} parent=1 // pred_check_branch
      %108 = sbr.rel (0) target = $region57
    $region56: #{tpu_custom_call.1} parent=1 // pred_region
      %110 = dma.done [#allocation9], 2048
    $region57: #{tpu_custom_call.1} parent=1 // pred_fallthru
      _
    %v111 = vld [vmem:[#allocation2] sm:$0xff]
    %v112 = vld [vmem:[#allocation2 + $0x8] sm:$0xff]
    %v113 = vld [vmem:[%s2] sm:$0x1]
    %v114 = vld [vmem:[%s4] sm:$0x1]
    %v115 = vld [vmem:[%s6] sm:$0x1]
    %v116 = vld [vmem:[%s8] sm:$0x1]
    %v117 = vld [vmem:[#allocation5] sm:$0xff]
    %v118 = vld [vmem:[#allocation5 + $0x8] sm:$0xff]
    %v119 = vld [vmem:[#allocation5 + $0x10] sm:$0xff]
    %v120 = vld [vmem:[#allocation5 + $0x18] sm:$0xff]
    %v121 = vld [vmem:[#allocation5 + $0x20] sm:$0xff]
    %v122 = vld [vmem:[#allocation5 + $0x28] sm:$0xff]
    %v123 = vld [vmem:[#allocation5 + $0x30] sm:$0xff]
    %v124 = vld [vmem:[#allocation5 + $0x38] sm:$0xff]
    %v125 = vld [vmem:[#allocation5 + $0x40] sm:$0xff]
    %v126 = vld [vmem:[#allocation5 + $0x48] sm:$0xff]
    %v127 = vld [vmem:[#allocation5 + $0x50] sm:$0xff]
    %v128 = vld [vmem:[#allocation5 + $0x58] sm:$0xff]
    %v129 = vld [vmem:[#allocation5 + $0x60] sm:$0xff]
    %v130 = vld [vmem:[#allocation5 + $0x68] sm:$0xff]
    %v131 = vld [vmem:[#allocation5 + $0x70] sm:$0xff]
    %v132 = vld [vmem:[#allocation5 + $0x78] sm:$0xff]
    %v134 = vperm.slane %v113, 0
    %136 = vmatpush.msra.mxu0 %v132
    %137 = vmatpush.msra.mxu0 %v131
    %138 = vmatpush.msra.mxu0 %v130
    %139 = vmatpush.msra.mxu0 %v129
    %140 = vmatpush.msra.mxu0 %v128
    %141 = vmatpush.msra.mxu0 %v127
    %142 = vmatpush.msra.mxu0 %v126
    %143 = vmatpush.msra.mxu0 %v125
    %144 = vmatpush.msra.mxu0 %v124
    %145 = vmatpush.msra.mxu0 %v123
    %146 = vmatpush.msra.mxu0 %v122
    %147 = vmatpush.msra.mxu0 %v121
    %148 = vmatpush.msra.mxu0 %v120
    %149 = vmatpush.msra.mxu0 %v119
    %150 = vmatpush.msra.mxu0 %v118
    %151 = vmatpush.msra.mxu0 %v117
    %152 = vmatmul.f32.gmra.mxu0 %v111
    %v153 = vpop.f32.mrf.mxu0
    %v154 = vadd.f32 %v134, %v153
    %155 = vmatmul.f32.gmra.mxu0 %v112
    %v156 = vpop.f32.mrf.mxu0
    %v157 = vadd.f32 %v134, %v156
    %158 = vdwg.mxu0
    %v159 = vmax.f32 %v154, 0.0
    %v160 = vmax.f32 %v157, 0.0
    %v161 = vadd.f32 %v111, %v159
    %v162 = vadd.f32 %v112, %v160
    %v163 = vld [vmem:[#allocation7] sm:$0xff]
    %v164 = vld [vmem:[#allocation7 + $0x8] sm:$0xff]
    %v165 = vld [vmem:[#allocation7 + $0x10] sm:$0xff]
    %v166 = vld [vmem:[#allocation7 + $0x18] sm:$0xff]
    %v167 = vld [vmem:[#allocation7 + $0x20] sm:$0xff]
    %v168 = vld [vmem:[#allocation7 + $0x28] sm:$0xff]
    %v169 = vld [vmem:[#allocation7 + $0x30] sm:$0xff]
    %v170 = vld [vmem:[#allocation7 + $0x38] sm:$0xff]
    %v171 = vld [vmem:[#allocation7 + $0x40] sm:$0xff]
    %v172 = vld [vmem:[#allocation7 + $0x48] sm:$0xff]
    %v173 = vld [vmem:[#allocation7 + $0x50] sm:$0xff]
    %v174 = vld [vmem:[#allocation7 + $0x58] sm:$0xff]
    %v175 = vld [vmem:[#allocation7 + $0x60] sm:$0xff]
    %v176 = vld [vmem:[#allocation7 + $0x68] sm:$0xff]
    %v177 = vld [vmem:[#allocation7 + $0x70] sm:$0xff]
    %v178 = vld [vmem:[#allocation7 + $0x78] sm:$0xff]
    %v180 = vperm.slane %v114, 0
    %182 = vmatpush.msra.mxu0 %v178
    %183 = vmatpush.msra.mxu0 %v177
    %184 = vmatpush.msra.mxu0 %v176
    %185 = vmatpush.msra.mxu0 %v175
    %186 = vmatpush.msra.mxu0 %v174
    %187 = vmatpush.msra.mxu0 %v173
    %188 = vmatpush.msra.mxu0 %v172
    %189 = vmatpush.msra.mxu0 %v171
    %190 = vmatpush.msra.mxu0 %v170
    %191 = vmatpush.msra.mxu0 %v169
    %192 = vmatpush.msra.mxu0 %v168
    %193 = vmatpush.msra.mxu0 %v167
    %194 = vmatpush.msra.mxu0 %v166
    %195 = vmatpush.msra.mxu0 %v165
    %196 = vmatpush.msra.mxu0 %v164
    %197 = vmatpush.msra.mxu0 %v163
    %198 = vmatmul.f32.gmra.mxu0 %v161
    %v199 = vpop.f32.mrf.mxu0
    %v200 = vadd.f32 %v180, %v199
    %201 = vmatmul.f32.gmra.mxu0 %v162
    %v202 = vpop.f32.mrf.mxu0
    %v203 = vadd.f32 %v180, %v202
    %204 = vdwg.mxu0
    %v205 = vmax.f32 %v200, 0.0
    %v206 = vmax.f32 %v203, 0.0
    %v207 = vadd.f32 %v161, %v205
    %v208 = vadd.f32 %v162, %v206
    %v209 = vld [vmem:[#allocation8] sm:$0xff]
    %v210 = vld [vmem:[#allocation8 + $0x8] sm:$0xff]
    %v211 = vld [vmem:[#allocation8 + $0x10] sm:$0xff]
    %v212 = vld [vmem:[#allocation8 + $0x18] sm:$0xff]
    %v213 = vld [vmem:[#allocation8 + $0x20] sm:$0xff]
    %v214 = vld [vmem:[#allocation8 + $0x28] sm:$0xff]
    %v215 = vld [vmem:[#allocation8 + $0x30] sm:$0xff]
    %v216 = vld [vmem:[#allocation8 + $0x38] sm:$0xff]
    %v217 = vld [vmem:[#allocation8 + $0x40] sm:$0xff]
    %v218 = vld [vmem:[#allocation8 + $0x48] sm:$0xff]
    %v219 = vld [vmem:[#allocation8 + $0x50] sm:$0xff]
    %v220 = vld [vmem:[#allocation8 + $0x58] sm:$0xff]
    %v221 = vld [vmem:[#allocation8 + $0x60] sm:$0xff]
    %v222 = vld [vmem:[#allocation8 + $0x68] sm:$0xff]
    %v223 = vld [vmem:[#allocation8 + $0x70] sm:$0xff]
    %v224 = vld [vmem:[#allocation8 + $0x78] sm:$0xff]
    %v226 = vperm.slane %v115, 0
    %228 = vmatpush.msra.mxu0 %v224
    %229 = vmatpush.msra.mxu0 %v223
    %230 = vmatpush.msra.mxu0 %v222
    %231 = vmatpush.msra.mxu0 %v221
    %232 = vmatpush.msra.mxu0 %v220
    %233 = vmatpush.msra.mxu0 %v219
    %234 = vmatpush.msra.mxu0 %v218
    %235 = vmatpush.msra.mxu0 %v217
    %236 = vmatpush.msra.mxu0 %v216
    %237 = vmatpush.msra.mxu0 %v215
    %238 = vmatpush.msra.mxu0 %v214
    %239 = vmatpush.msra.mxu0 %v213
    %240 = vmatpush.msra.mxu0 %v212
    %241 = vmatpush.msra.mxu0 %v211
    %242 = vmatpush.msra.mxu0 %v210
    %243 = vmatpush.msra.mxu0 %v209
    %244 = vmatmul.f32.gmra.mxu0 %v207
    %v245 = vpop.f32.mrf.mxu0
    %v246 = vadd.f32 %v226, %v245
    %247 = vmatmul.f32.gmra.mxu0 %v208
    %v248 = vpop.f32.mrf.mxu0
    %v249 = vadd.f32 %v226, %v248
    %250 = vdwg.mxu0
    %v251 = vmax.f32 %v246, 0.0
    %v252 = vmax.f32 %v249, 0.0
    %v253 = vadd.f32 %v207, %v251
    %v254 = vadd.f32 %v208, %v252
    %v255 = vld [vmem:[#allocation10] sm:$0xff]
    %v256 = vld [vmem:[#allocation10 + $0x8] sm:$0xff]
    %v257 = vld [vmem:[#allocation10 + $0x10] sm:$0xff]
    %v258 = vld [vmem:[#allocation10 + $0x18] sm:$0xff]
    %v259 = vld [vmem:[#allocation10 + $0x20] sm:$0xff]
    %v260 = vld [vmem:[#allocation10 + $0x28] sm:$0xff]
    %v261 = vld [vmem:[#allocation10 + $0x30] sm:$0xff]
    %v262 = vld [vmem:[#allocation10 + $0x38] sm:$0xff]
    %v263 = vld [vmem:[#allocation10 + $0x40] sm:$0xff]
    %v264 = vld [vmem:[#allocation10 + $0x48] sm:$0xff]
    %v265 = vld [vmem:[#allocation10 + $0x50] sm:$0xff]
    %v266 = vld [vmem:[#allocation10 + $0x58] sm:$0xff]
    %v267 = vld [vmem:[#allocation10 + $0x60] sm:$0xff]
    %v268 = vld [vmem:[#allocation10 + $0x68] sm:$0xff]
    %v269 = vld [vmem:[#allocation10 + $0x70] sm:$0xff]
    %v270 = vld [vmem:[#allocation10 + $0x78] sm:$0xff]
    %v272 = vperm.slane %v116, 0
    %274 = vmatpush.msra.mxu0 %v270
    %275 = vmatpush.msra.mxu0 %v269
    %276 = vmatpush.msra.mxu0 %v268
    %277 = vmatpush.msra.mxu0 %v267
    %278 = vmatpush.msra.mxu0 %v266
    %279 = vmatpush.msra.mxu0 %v265
    %280 = vmatpush.msra.mxu0 %v264
    %281 = vmatpush.msra.mxu0 %v263
    %282 = vmatpush.msra.mxu0 %v262
    %283 = vmatpush.msra.mxu0 %v261
    %284 = vmatpush.msra.mxu0 %v260
    %285 = vmatpush.msra.mxu0 %v259
    %286 = vmatpush.msra.mxu0 %v258
    %287 = vmatpush.msra.mxu0 %v257
    %288 = vmatpush.msra.mxu0 %v256
    %289 = vmatpush.msra.mxu0 %v255
    %290 = vmatmul.f32.gmra.mxu0 %v253
    %v291 = vpop.f32.mrf.mxu0
    %v292 = vadd.f32 %v272, %v291
    %293 = vmatmul.f32.gmra.mxu0 %v254
    %v294 = vpop.f32.mrf.mxu0
    %v295 = vadd.f32 %v272, %v294
    %296 = vdwg.mxu0
    %v297 = vmax.f32 %v292, 0.0
    %v298 = vmax.f32 %v295, 0.0
    %v299 = vadd.f32 %v253, %v297
    %v300 = vadd.f32 %v254, %v298
    %301 = vst [vmem:[#allocation11] sm:$0xff] %v299
    %302 = vst [vmem:[#allocation11 + $0x8] sm:$0xff] %v300
    // Predicated region
    $region58: #{tpu_custom_call.1} parent=1 // pred_check
      _
    $region59: #{tpu_custom_call.1} parent=1 // pred_check_branch
      %304 = sbr.rel (0) target = $region61
    $region60: #{tpu_custom_call.1} parent=1 // pred_region
      %306 = vsyncadd [#allocation4], 0
      %s307 = sshll.u32 [#allocation11], 4
      %s308 = int_to_ptr.vmem [resolvable:$true] %s307
      %s309 = sshll.u32 %s9, 4
      %s310 = int_to_ptr.hbm [resolvable:$true] %s309
      %315 = dma.vmem_to_hbm [thread:$0]  %s308, 256, %s310, [#allocation4], 128, 128, 8
    $region61: #{tpu_custom_call.1} parent=1 // pred_fallthru
      _
    // Predicated region
    $region62: #{tpu_custom_call.1} parent=1 // pred_check
      _
    $region63: #{tpu_custom_call.1} parent=1 // pred_check_branch
      %317 = sbr.rel (0) target = $region65
    $region64: #{tpu_custom_call.1} parent=1 // pred_region
      %319 = dma.done [#allocation4], 256
    $region65: #{tpu_custom_call.1} parent=1 // pred_fallthru
      _
    %320 = vsyncpa [#allocation3], 1
    %321 = vsyncpa [#allocation6], 1
    %322 = vsyncpa [#allocation9], 1
    %323 = vsyncpa [#allocation4], 1

</llo_original>
